<compile_context>
chip_gen: v6e
topology: v6e:2x2x1
jax: 0.10.0
libtpu: 0.0.40
codegen_flags: <defaults>
</compile_context>

<pallas_src>
import jax
import jax.numpy as jnp
from jax.experimental import pallas as pl
from jax.experimental.pallas import tpu as pltpu

# ---------------- configuration (small, consistent with the module) ----------
NUM_MODELS = 4      # len(checkpoints)
CHANNELS   = 4      # input channels
HIDDEN     = 32     # hidden width of the synthetic base model
BATCH      = 2
HEIGHT     = 16
WIDTH      = 16
MH         = NUM_MODELS * HIDDEN   # 128 — fused hidden dim, fills the lane width

# Grid-level pixel-tile cap.  With in-kernel chunking the (MH, TILE) hidden never
# materializes at full tile width, so VMEM holds only the small double-buffered
# x/out tiles; 2048 lanes amortizes the ~0.35us per-step overhead while staying far
# under v7x's 64 MiB VMEM (no vmem_limit override needed).
MAX_TILE_HW = 2048
# In-kernel lane chunk: keeps the live (MH, chunk) f32 hidden at ~32 vregs.
LANE_CHUNK = 256


def bagged_kernel(x_ref, w1t_ref, b1_ref, w2_ref, bias_ref, o_ref):
    """One (batch, pixel-tile) grid step of the fused bagged forward.

    x_ref   : (C, TILE_HW)    input pixels of one batch element, pixels on lanes
    w1t_ref : (MH, C)         fused first-layer weights (all models concatenated)
    b1_ref  : (MH, 1)         fused first-layer biases
    w2_ref  : (MH, 1)         fused second-layer weights, 1/M pre-folded
    bias_ref: (1, 1) SMEM     sum_m(b2_m - th_m) / M
    o_ref   : (1, TILE_HW)    mean over models of (logit_m - th_m), lane-dense
    """
    tile = x_ref.shape[-1]
    chunk = next((c for c in (LANE_CHUNK, 128) if tile >= c and tile % c == 0), tile)
    n_chunks = tile // chunk

    # Weight loads hoisted out of the chunk loop (weights are grid-resident).
    w1t = w1t_ref[...]            # (MH, C)
    b1  = b1_ref[...]             # (MH, 1)  lane-broadcast per chunk
    w2  = w2_ref[...]             # (MH, 1)  1/M folded
    bias = bias_ref[0, 0]

    def body(ci, carry):
        off = pl.multiple_of(ci * chunk, chunk)
        xc = x_ref[:, pl.ds(off, chunk)]                                # (C, chunk)
        h = jnp.dot(w1t, xc, preferred_element_type=jnp.float32)        # MXU, (MH, chunk)
        h = jnp.maximum(h + b1, 0.0)                                    # bias + ReLU (VPU)
        # Layer 2 as lane-parallel scale + sublane reduce (VPU/XLU) instead of a
        # rank-1 MXU matmul: h never gets pushed back through the MXU path.
        acc = jnp.sum(h * w2, axis=0, keepdims=True)                    # (1, chunk)
        o_ref[:, pl.ds(off, chunk)] = acc + bias                        # lane-dense store
        return carry

    jax.lax.fori_loop(0, n_chunks, body, 0, unroll=True)


def _pick_tile_hw(hw, max_tile=MAX_TILE_HW):
    """Largest lane-friendly pixel tile that divides HW (<= max_tile)."""
    if hw <= max_tile:
        return hw
    for step in (LANE_CHUNK, 128):
        for t in range(max_tile - max_tile % step, step - 1, -step):
            if hw % t == 0:
                return t
    # TODO(synk): pad the pixel axis for awkward HW instead of one full-width tile.
    return hw


def bagged_forward(x_nchw, w1, b1, w2, b2, thresholds):
    """x_nchw: (B, C, H, W) f32; w1:(M,C,HID); b1:(M,HID); w2:(M,HID,1); b2:(M,1);
    thresholds:(M,).  Returns (B, H, W) f32."""
    B, C, H, W = x_nchw.shape
    HW = H * W
    M, _, HID = w1.shape
    mh = M * HID

    # Free view of the contiguous NCHW input — no extra HBM transpose pass over x.
    x_view = x_nchw.reshape(B, C, HW).astype(jnp.float32)

    # Fuse the bag along the hidden axis (wrapper-side layout plumbing, no compute).
    w1t = jnp.transpose(w1, (0, 2, 1)).reshape(mh, C).astype(jnp.float32)     # (MH, C)
    b1c = b1.reshape(mh, 1).astype(jnp.float32)                               # (MH, 1)
    w2c = (w2.reshape(mh, 1) * (1.0 / M)).astype(jnp.float32)                 # (MH, 1), 1/M folded
    bias = (jnp.sum(b2.reshape(-1) - thresholds.reshape(-1)) / M)
    bias = bias.reshape(1, 1).astype(jnp.float32)                             # SMEM scalar

    # TODO(synk): optional bf16 x/weights (f32 accumulate) would halve HBM traffic
    # on v5e/v6e; kept f32 here to preserve the tight match against the reference.

    tile_hw = _pick_tile_hw(HW)
    grid = (B, HW // tile_hw)

    out = pl.pallas_call(
        bagged_kernel,
        out_shape=jax.ShapeDtypeStruct((B, 1, HW), jnp.float32),
        grid=grid,
        in_specs=[
            pl.BlockSpec((pl.Squeezed(), C, tile_hw), lambda b, i: (b, 0, i)),  # x tile
            pl.BlockSpec((mh, C), lambda b, i: (0, 0)),                         # fused W1^T (resident)
            pl.BlockSpec((mh, 1), lambda b, i: (0, 0)),                         # fused b1
            pl.BlockSpec((mh, 1), lambda b, i: (0, 0)),                         # fused w2 column
            pl.BlockSpec(memory_space=pltpu.MemorySpace.SMEM),                  # scalar (b2 - th) mean
        ],
        out_specs=pl.BlockSpec((pl.Squeezed(), 1, tile_hw), lambda b, i: (b, 0, i)),
        compiler_params=pltpu.CompilerParams(
            dimension_semantics=("parallel", "parallel")),
    )(x_view, w1t, b1c, w2c, bias)

    return out.reshape(B, H, W)


def reference_forward(x_nchw, w1, b1, w2, b2, thresholds):
    """Pure-JAX mirror of the PyTorch forward (stack / subtract threshold / mean)."""
    xf = jnp.transpose(x_nchw, (0, 2, 3, 1))                      # (B, H, W, C)
    per_model = []
    for m in range(NUM_MODELS):
        h = jnp.maximum(
            jnp.einsum("bhwc,cd->bhwd", xf, w1[m],
                       precision=jax.lax.Precision.HIGHEST) + b1[m], 0.0)
        z = jnp.einsum("bhwd,d->bhw", h, w2[m, :, 0],
                       precision=jax.lax.Precision.HIGHEST) + b2[m, 0]
        per_model.append(z)
    logit_list = jnp.stack(per_model, axis=0)                     # (M, B, H, W)
    logit_list = logit_list - thresholds.reshape(-1, 1, 1, 1)     # thresholds.view(-1,1,1,1)
    return jnp.mean(logit_list, axis=0)                           # (B, H, W)


if __name__ == "__main__":
    key = jax.random.PRNGKey(0)
    k_x, k_w1, k_b1, k_w2, k_b2, k_th = jax.random.split(key, 6)

    # Deterministic synthetic "checkpoint" parameters for the model bag.
    # TODO(synk): checkpoint loading / SWA AveragedModel unwrapping is host-side
    # state management with no kernel equivalent; parameters are synthesized here.
    x = jax.random.normal(k_x, (BATCH, CHANNELS, HEIGHT, WIDTH), jnp.float32)
    w1 = jax.random.normal(k_w1, (NUM_MODELS, CHANNELS, HIDDEN), jnp.float32) * 0.3
    b1 = jax.random.normal(k_b1, (NUM_MODELS, HIDDEN), jnp.float32) * 0.1
    w2 = jax.random.normal(k_w2, (NUM_MODELS, HIDDEN, 1), jnp.float32) * 0.3
    b2 = jax.random.normal(k_b2, (NUM_MODELS, 1), jnp.float32) * 0.1
    # "adaptive_threshold=True" path: logits of probabilities in (0, 1).
    probs = jax.random.uniform(k_th, (NUM_MODELS,), jnp.float32, 0.2, 0.8)
    thresholds = jnp.log(probs / (1.0 - probs))                   # torch.logit

    out = bagged_forward(x, w1, b1, w2, b2, thresholds)
    out = jax.block_until_ready(out)

    ref = reference_forward(x, w1, b1, w2, b2, thresholds)
    assert out.shape == (BATCH, HEIGHT, WIDTH)
    # The kernel's layer-1 dot uses Mosaic's default matmul precision (near-f32 at
    # K=4) while the reference uses Precision.HIGHEST; tolerance is set so the
    # comparison is well-defined across TPU generations.
    assert jnp.allclose(out, ref, atol=1e-4, rtol=1e-4), "mismatch vs reference"

    print("KERNEL_OK")
</pallas_src>

<mosaic_0001>
module attributes {stable_mosaic.version = 11 : i64} {
  func.func @bagged_kernel(%arg0: i32, %arg1: i32, %arg2: memref<1x4x256xf32, #tpu.memory_space<vmem>>, %arg3: memref<128x4xf32, #tpu.memory_space<vmem>>, %arg4: memref<128x1xf32, #tpu.memory_space<vmem>>, %arg5: memref<128x1xf32, #tpu.memory_space<vmem>>, %arg6: memref<1x1xf32, #tpu.memory_space<smem>>, %arg7: memref<1x1x256xf32, #tpu.memory_space<vmem>>) attributes {dimension_semantics = [#tpu.dimension_semantics<parallel>, #tpu.dimension_semantics<parallel>], iteration_bounds = array<i64: 2, 1>, scalar_prefetch = 0 : i64, scratch_operands = 0 : i64, tpu.core_type = #tpu.core_type<tc>, window_params = [{transform_indices = @transform_0, window_bounds = array<i64: 1, 4, 256>}, {pipeline_mode = #tpu.pipeline_mode<synchronous>, transform_indices = @transform_1, window_bounds = array<i64: 128, 4>}, {pipeline_mode = #tpu.pipeline_mode<synchronous>, transform_indices = @transform_2, window_bounds = array<i64: 128, 1>}, {pipeline_mode = #tpu.pipeline_mode<synchronous>, transform_indices = @transform_3, window_bounds = array<i64: 128, 1>}, {transform_indices = @transform_4, window_bounds = array<i64: 1, 1>}, {transform_indices = @transform_5, window_bounds = array<i64: 1, 1, 256>}]} {
    %c0 = arith.constant 0 : index
    %c0_0 = arith.constant 0 : index
    %0 = vector.load %arg3[%c0, %c0_0] : memref<128x4xf32, #tpu.memory_space<vmem>>, vector<128x4xf32>
    %c0_1 = arith.constant 0 : index
    %c0_2 = arith.constant 0 : index
    %1 = vector.load %arg4[%c0_1, %c0_2] : memref<128x1xf32, #tpu.memory_space<vmem>>, vector<128x1xf32>
    %c0_3 = arith.constant 0 : index
    %c0_4 = arith.constant 0 : index
    %2 = vector.load %arg5[%c0_3, %c0_4] : memref<128x1xf32, #tpu.memory_space<vmem>>, vector<128x1xf32>
    %c0_5 = arith.constant 0 : index
    %c0_6 = arith.constant 0 : index
    %3 = memref.load %arg6[%c0_5, %c0_6] : memref<1x1xf32, #tpu.memory_space<smem>>
    %c0_i32 = arith.constant 0 : i32
    %c256_i32 = arith.constant 256 : i32
    %4 = arith.muli %c0_i32, %c256_i32 : i32
    %5 = tpu.assume_multiple %4, 256 : i32
    %c0_7 = arith.constant 0 : index
    %c0_8 = arith.constant 0 : index
    %6 = arith.index_cast %5 : i32 to index
    %7 = vector.load %arg2[%c0_7, %c0_8, %6] : memref<1x4x256xf32, #tpu.memory_space<vmem>>, vector<1x4x256xf32>
    %8 = vector.shape_cast %7 : vector<1x4x256xf32> to vector<4x256xf32>
    %cst = arith.constant dense<0.000000e+00> : vector<128x256xf32>
    %9 = tpu.matmul %0, %8, %cst {dimension_numbers = #tpu.dot_dimension_numbers<[1], [0], [0], [1], [0, 0, 1, 1], [], []>} : vector<128x4xf32>, vector<4x256xf32>, vector<128x256xf32> -> vector<128x256xf32>
    %10 = vector.broadcast %1 : vector<128x1xf32> to vector<128x256xf32>
    %11 = arith.addf %9, %10 : vector<128x256xf32>
    %cst_9 = arith.constant 0.000000e+00 : f32
    %12 = vector.broadcast %cst_9 : f32 to vector<128x256xf32>
    %13 = arith.maximumf %11, %12 : vector<128x256xf32>
    %14 = vector.broadcast %2 : vector<128x1xf32> to vector<128x256xf32>
    %15 = arith.mulf %13, %14 : vector<128x256xf32>
    %cst_10 = arith.constant dense<0.000000e+00> : vector<256xf32>
    %16 = vector.multi_reduction <add>, %15, %cst_10 [0] : vector<128x256xf32> to vector<256xf32>
    %17 = vector.shape_cast %16 : vector<256xf32> to vector<1x256xf32>
    %18 = vector.broadcast %3 : f32 to vector<1x256xf32>
    %19 = arith.addf %17, %18 : vector<1x256xf32>
    %c0_11 = arith.constant 0 : index
    %c0_12 = arith.constant 0 : index
    %20 = arith.index_cast %5 : i32 to index
    %21 = vector.load %arg7[%c0_11, %c0_12, %20] : memref<1x1x256xf32, #tpu.memory_space<vmem>>, vector<1x1x256xf32>
    %22 = vector.shape_cast %21 : vector<1x1x256xf32> to vector<1x256xf32>
    %23 = vector.shape_cast %19 : vector<1x256xf32> to vector<1x1x256xf32>
    tpu.vector_store %arg7[%c0_11, %c0_12, %20], %23 {strides = array<i32>} : memref<1x1x256xf32, #tpu.memory_space<vmem>>, vector<1x1x256xf32>,
    %c1_i32 = arith.constant 1 : i32
    return
  }
  func.func @transform_0(%arg0: i32, %arg1: i32) -> (i32, i32, i32) {
    %c0_i32 = arith.constant 0 : i32
    %c0_i32_0 = arith.constant 0 : i32
    return %arg0, %c0_i32, %arg1 : i32, i32, i32
  }
  func.func @transform_1(%arg0: i32, %arg1: i32) -> (i32, i32) {
    %c0_i32 = arith.constant 0 : i32
    %c0_i32_0 = arith.constant 0 : i32
    %c0_i32_1 = arith.constant 0 : i32
    return %c0_i32, %c0_i32_0 : i32, i32
  }
  func.func @transform_2(%arg0: i32, %arg1: i32) -> (i32, i32) {
    %c0_i32 = arith.constant 0 : i32
    %c0_i32_0 = arith.constant 0 : i32
    %c0_i32_1 = arith.constant 0 : i32
    return %c0_i32, %c0_i32_0 : i32, i32
  }
  func.func @transform_3(%arg0: i32, %arg1: i32) -> (i32, i32) {
    %c0_i32 = arith.constant 0 : i32
    %c0_i32_0 = arith.constant 0 : i32
    %c0_i32_1 = arith.constant 0 : i32
    return %c0_i32, %c0_i32_0 : i32, i32
  }
  func.func @transform_4(%arg0: i32, %arg1: i32) -> (i32, i32) {
    %c0_i32 = arith.constant 0 : i32
    %c0_i32_0 = arith.constant 0 : i32
    %c0_i32_1 = arith.constant 0 : i32
    return %c0_i32, %c0_i32_0 : i32, i32
  }
  func.func @transform_5(%arg0: i32, %arg1: i32) -> (i32, i32, i32) {
    %c0_i32 = arith.constant 0 : i32
    %c0_i32_0 = arith.constant 0 : i32
    return %arg0, %c0_i32, %arg1 : i32, i32, i32
  }
}

</mosaic_0001>

<llo_original>
// kernel: tpu_custom_call.1
$region0: #{tpu_custom_call.1}
  #allocation0 [shape = 'u32[]', space=smem, size = 0x4, offset = 0x4, fixed_abs, tag = 'smem constant byte address 0x4 - core index']
  #allocation1 [shape = 'u32[144,128]{1,0:T(1,128)}', space=vmem, size = 0x12000, scoped, tag = 'internal scratch']
  #allocation2 [shape = 'f32[1,1]{1,0:T(1,128)S(6)}', space=smem, size = 0x200, scoped, tag = 'scoped memory for tpu_custom_call.1']
  %s0 = inlined_call_operand.vmem [shape: f32[2,4,256], index: 0, kind: input, shape index: {}]
  %s1 = inlined_call_operand.vmem [shape: f32[128,4], index: 1, kind: input, shape index: {}]
  %s2 = inlined_call_operand.vmem [shape: f32[128,1], index: 2, kind: input, shape index: {}]
  %s3 = inlined_call_operand.vmem [shape: f32[128,1], index: 3, kind: input, shape index: {}]
  %s4 = inlined_call_operand.<no memory space> [shape: f32[1,1], index: 4, kind: input, shape index: {}]
  %s5 = inlined_call_operand.hbm [shape: f32[2,1,256], index: 5, kind: output, shape index: {}]
  %s6 = sld [smem:[#allocation0]]
  $region53: #{tpu_custom_call.1} parent=0
    _
  %s8 = ssub.s32 1, %s6
  %s9 = scalar_select 0, %s8, %s6
  %10 = sst [smem:[#allocation2]] %s4
  $region1: #{tpu_custom_call.1} parent=0
    #allocation3 [shape = 'u8[2048]{0}', space=vmem, size = 0x800, scoped, tag = 'output window, operand 0']
    #allocation4 [shape = 's32[2]{0}', space=sflag, size = 0x8, scoped, tag = 'scoped memory for tpu_custom_call.1']
    %11 = vsyncpa [#allocation4], 0
    %s12 = scalar_lea.sflag [#allocation4], 1
    %13 = vsyncpa %s12, 0
    loop: start=0, step=1, limit=4
    $region2: #{tpu_custom_call.1} parent=1 // loop_pre_header
      _
    $region3: #{tpu_custom_call.1} parent=1 // loop_header
      %s15 = sphi 0, %s19
      %p16 = scmp.ge.s32.totalorder %s15, 4
      %s22 = sphi 0, %s34
      %s23 = sphi 0, %s30
      %s24 = sphi 0, %s22
      %s25 = sphi 0, %s23
      %s26 = sphi 0, %s24
      %s27 = sphi 0, %s25
      %s39 = sphi 0, %s41
      %s42 = sphi 0, %s39
      %s43 = sphi 0, %s42
      %s59 = sphi 0, %s43
      %s63 = sphi 0, %s63
      %s65 = sphi 0, %s63
      %s66 = sphi 0, %s65
      %s80 = sphi 0, %s66
      %s84 = sphi 0, %s84
      %s86 = sphi 0, %s84
      %s87 = sphi 0, %s86
      %s101 = sphi 0, %s87
      %s105 = sphi 0, %s105
      %s107 = sphi 0, %s105
      %s108 = sphi 0, %s107
      %s122 = sphi 0, %s108
      %s126 = sphi 0, %s126
      %s128 = sphi 0, %s126
      %s129 = sphi 0, %s128
      %s143 = sphi 0, %s129
      %s151 = sphi 0, %s153
      %s154 = sphi 0, %s151
      %s155 = sphi 0, %s154
      %s171 = sphi 0, %s155
    $region4: #{tpu_custom_call.1} parent=1 // loop_header_branch
      %18 = sbr.rel (%p16) target = $region8
    $region5: #{tpu_custom_call.1} parent=1 // loop_body
      %s20 = ssub.s32 %s15, 1
      %s21 = ssub.s32 %s15, 2
      %s28 = sadd.s32 1, %s23
      %p29 = scmp.ge.s32.totalorder %s28, 1
      %s30 = scalar_select %p29, 0, %s28
      %s31 = sadd.s32 1, %s22
      %s32 = scalar_select %p29, %s31, %s22
      %p33 = scmp.ge.s32.totalorder %s32, 2
      %s34 = scalar_select %p33, 0, %s32
      %s35 = ssub.s32 %s22, %s34
      %s36 = ssub.s32 %s23, %s30
      %s37 = sor.u32 %s35, %s36
      %p38 = scmp.eq.s32.totalorder %s37, 0
      %s40 = sadd.s32 %s39, 1
      %s41 = scalar_select %p38, %s39, %s40
      %p44 = pneg %p38
      %p45 = scmp.eq.s32.totalorder %s15, 1
      %p46 = por %p44, %p45
      %p47 = scmp.ne.s32.totalorder %s39, %s42
      %p48 = scmp.eq.s32.totalorder %s15, 0
      %p49 = por %p47, %p48
      %p50 = scmp.ne.s32.totalorder %s39, %s42
      %p51 = scmp.eq.s32.totalorder %s20, 1
      %p52 = por %p50, %p51
      %p53 = scmp.ne.s32.totalorder %s42, %s43
      %p54 = scmp.eq.s32.totalorder %s20, 0
      %p55 = por %p53, %p54
      %p56 = scmp.ne.s32.totalorder %s42, %s43
      %p57 = scmp.eq.s32.totalorder %s21, 1
      %p58 = por %p56, %p57
      %p60 = scmp.ne.s32.totalorder %s43, %s59
      %p61 = scmp.eq.s32.totalorder %s21, 0
      %p62 = por %p60, %p61
      %s64 = sadd.s32 %s63, 1
      %p67 = scmp.eq.s32.totalorder %s15, 1
      %p68 = scmp.ne.s32.totalorder %s63, %s65
      %p69 = scmp.eq.s32.totalorder %s15, 0
      %p70 = por %p68, %p69
      %p71 = scmp.ne.s32.totalorder %s63, %s65
      %p72 = scmp.eq.s32.totalorder %s20, 1
      %p73 = por %p71, %p72
      %p74 = scmp.ne.s32.totalorder %s65, %s66
      %p75 = scmp.eq.s32.totalorder %s20, 0
      %p76 = por %p74, %p75
      %p77 = scmp.ne.s32.totalorder %s65, %s66
      %p78 = scmp.eq.s32.totalorder %s21, 1
      %p79 = por %p77, %p78
      %p81 = scmp.ne.s32.totalorder %s66, %s80
      %p82 = scmp.eq.s32.totalorder %s21, 0
      %p83 = por %p81, %p82
      %s85 = sadd.s32 %s84, 1
      %p88 = scmp.eq.s32.totalorder %s15, 1
      %p89 = scmp.ne.s32.totalorder %s84, %s86
      %p90 = scmp.eq.s32.totalorder %s15, 0
      %p91 = por %p89, %p90
      %p92 = scmp.ne.s32.totalorder %s84, %s86
      %p93 = scmp.eq.s32.totalorder %s20, 1
      %p94 = por %p92, %p93
      %p95 = scmp.ne.s32.totalorder %s86, %s87
      %p96 = scmp.eq.s32.totalorder %s20, 0
      %p97 = por %p95, %p96
      %p98 = scmp.ne.s32.totalorder %s86, %s87
      %p99 = scmp.eq.s32.totalorder %s21, 1
      %p100 = por %p98, %p99
      %p102 = scmp.ne.s32.totalorder %s87, %s101
      %p103 = scmp.eq.s32.totalorder %s21, 0
      %p104 = por %p102, %p103
      %s106 = sadd.s32 %s105, 1
      %p109 = scmp.eq.s32.totalorder %s15, 1
      %p110 = scmp.ne.s32.totalorder %s105, %s107
      %p111 = scmp.eq.s32.totalorder %s15, 0
      %p112 = por %p110, %p111
      %p113 = scmp.ne.s32.totalorder %s105, %s107
      %p114 = scmp.eq.s32.totalorder %s20, 1
      %p115 = por %p113, %p114
      %p116 = scmp.ne.s32.totalorder %s107, %s108
      %p117 = scmp.eq.s32.totalorder %s20, 0
      %p118 = por %p116, %p117
      %p119 = scmp.ne.s32.totalorder %s107, %s108
      %p120 = scmp.eq.s32.totalorder %s21, 1
      %p121 = por %p119, %p120
      %p123 = scmp.ne.s32.totalorder %s108, %s122
      %p124 = scmp.eq.s32.totalorder %s21, 0
      %p125 = por %p123, %p124
      %s127 = sadd.s32 %s126, 1
      %p130 = scmp.eq.s32.totalorder %s15, 1
      %p131 = scmp.ne.s32.totalorder %s126, %s128
      %p132 = scmp.eq.s32.totalorder %s15, 0
      %p133 = por %p131, %p132
      %p134 = scmp.ne.s32.totalorder %s126, %s128
      %p135 = scmp.eq.s32.totalorder %s20, 1
      %p136 = por %p134, %p135
      %p137 = scmp.ne.s32.totalorder %s128, %s129
      %p138 = scmp.eq.s32.totalorder %s20, 0
      %p139 = por %p137, %p138
      %p140 = scmp.ne.s32.totalorder %s128, %s129
      %p141 = scmp.eq.s32.totalorder %s21, 1
      %p142 = por %p140, %p141
      %p144 = scmp.ne.s32.totalorder %s129, %s143
      %p145 = scmp.eq.s32.totalorder %s21, 0
      %p146 = por %p144, %p145
      %s147 = ssub.s32 %s22, %s34
      %s148 = ssub.s32 %s23, %s30
      %s149 = sor.u32 %s147, %s148
      %p150 = scmp.eq.s32.totalorder %s149, 0
      %s152 = sadd.s32 %s151, 1
      %s153 = scalar_select %p150, %s151, %s152
      %p156 = pneg %p150
      %p157 = scmp.eq.s32.totalorder %s15, 1
      %p158 = por %p156, %p157
      %p159 = scmp.ne.s32.totalorder %s151, %s154
      %p160 = scmp.eq.s32.totalorder %s15, 0
      %p161 = por %p159, %p160
      %p162 = scmp.ne.s32.totalorder %s151, %s154
      %p163 = scmp.eq.s32.totalorder %s20, 1
      %p164 = por %p162, %p163
      %p165 = scmp.ne.s32.totalorder %s154, %s155
      %p166 = scmp.eq.s32.totalorder %s20, 0
      %p167 = por %p165, %p166
      %p168 = scmp.ne.s32.totalorder %s154, %s155
      %p169 = scmp.eq.s32.totalorder %s21, 1
      %p170 = por %p168, %p169
      %p172 = scmp.ne.s32.totalorder %s155, %s171
      %p173 = scmp.eq.s32.totalorder %s21, 0
      %p174 = por %p172, %p173
      %p175 = scmp.le.s32.totalorder 1, %s15
      %p176 = scmp.lt.s32.totalorder %s15, 3
      %p177 = pnand %p175, %p176
      %p178 = pneg %p177
      // Predicated region
      $region9: #{tpu_custom_call.1} parent=5 // pred_check
        _
      $region10: #{tpu_custom_call.1} parent=5 // pred_check_branch
        %180 = sbr.rel (%p177) target = $region12
      $region11: #{tpu_custom_call.1} parent=5 // pred_region
        %s181 = ssub.s32 %s15, 1
        // Predicated region
        $region13: #{tpu_custom_call.1} parent=11 // pred_check
          %p182 = pneg %p76
        $region14: #{tpu_custom_call.1} parent=11 // pred_check_branch
          %184 = sbr.rel (%p182) target = $region16
        $region15: #{tpu_custom_call.1} parent=11 // pred_region
          _
        $region16: #{tpu_custom_call.1} parent=11 // pred_fallthru
          _
        // Predicated region
        $region17: #{tpu_custom_call.1} parent=11 // pred_check
          %p185 = pneg %p97
        $region18: #{tpu_custom_call.1} parent=11 // pred_check_branch
          %187 = sbr.rel (%p185) target = $region20
        $region19: #{tpu_custom_call.1} parent=11 // pred_region
          _
        $region20: #{tpu_custom_call.1} parent=11 // pred_fallthru
          _
        // Predicated region
        $region21: #{tpu_custom_call.1} parent=11 // pred_check
          %p188 = pneg %p118
        $region22: #{tpu_custom_call.1} parent=11 // pred_check_branch
          %190 = sbr.rel (%p188) target = $region24
        $region23: #{tpu_custom_call.1} parent=11 // pred_region
          _
        $region24: #{tpu_custom_call.1} parent=11 // pred_fallthru
          _
        // Predicated region
        $region25: #{tpu_custom_call.1} parent=11 // pred_check
          %p191 = pneg %p139
        $region26: #{tpu_custom_call.1} parent=11 // pred_check_branch
          %193 = sbr.rel (%p191) target = $region28
        $region27: #{tpu_custom_call.1} parent=11 // pred_region
          _
        $region28: #{tpu_custom_call.1} parent=11 // pred_fallthru
          _
      $region12: #{tpu_custom_call.1} parent=5 // pred_fallthru
        _
      %p194 = scmp.lt.s32.totalorder %s15, 2
      // Predicated region
      $region29: #{tpu_custom_call.1} parent=5 // pred_check
        %p195 = pneg %p194
      $region30: #{tpu_custom_call.1} parent=5 // pred_check_branch
        %197 = sbr.rel (%p195) target = $region32
      $region31: #{tpu_custom_call.1} parent=5 // pred_region
        // Predicated region
        $region33: #{tpu_custom_call.1} parent=31 // pred_check
          %p198 = pneg %p49
        $region34: #{tpu_custom_call.1} parent=31 // pred_check_branch
          %200 = sbr.rel (%p198) target = $region36
        $region35: #{tpu_custom_call.1} parent=31 // pred_region
          %s201 = smul.u32 2, %s23
          %p202 = scmp.lt.s32.totalorder %s22, 1
          %s203 = scalar_select %p202, %s22, 1
          %p204 = scmp.lt.s32.totalorder %s201, 1
          %s205 = scalar_select %p204, %s201, 1
          %s206 = smul.addr %s203, 2
          %s207 = sadd.s32 %s205, %s206
          %s208 = smul.addr %s207, 4
          %s209 = scalar_lea.vmem %s0, %s208
          %s210 = smul.u32 2, %s23
        $region36: #{tpu_custom_call.1} parent=31 // pred_fallthru
          _
      $region32: #{tpu_custom_call.1} parent=5 // pred_fallthru
        _
      %p211 = scmp.le.s32.totalorder 1, %s15
      %p212 = scmp.lt.s32.totalorder %s15, 3
      %p213 = pnand %p211, %p212
      %p214 = pneg %p213
      // Predicated region
      $region37: #{tpu_custom_call.1} parent=5 // pred_check
        _
      $region38: #{tpu_custom_call.1} parent=5 // pred_check_branch
        %216 = sbr.rel (%p213) target = $region40
      $region39: #{tpu_custom_call.1} parent=5 // pred_region
        %s217 = ssub.s32 %s15, 1
        %s218 = smul.u32 2, %s25
        %p219 = scmp.lt.s32.totalorder %s24, 1
        %s220 = scalar_select %p219, %s24, 1
        %p221 = scmp.lt.s32.totalorder %s218, 1
        %s222 = scalar_select %p221, %s218, 1
        %s223 = smul.addr %s220, 2
        %s224 = sadd.s32 %s222, %s223
        %s225 = smul.addr %s224, 4
        %s226 = scalar_lea.vmem %s0, %s225
        %p227 = pneg %p55
        %p228 = pneg %p52
        %p229 = pneg %p76
        %p230 = pneg %p73
        %p231 = pneg %p97
        %p232 = pneg %p94
        %p233 = pneg %p118
        %p234 = pneg %p115
        %p235 = pneg %p139
        %p236 = pneg %p136
        %p237 = pneg %p167
        %p238 = pneg %p164
        %s239 = sand.u32 %s154, 1
        %s240 = scalar_lea.sflag [#allocation4], %s239
        %s241 = sand.u32 %s154, 1
        %s242 = smul.addr %s241, 2
        %s243 = scalar_lea.vmem [#allocation3], %s242
        %s244 = smul.u32 2, %s25
        %p245 = scmp.lt.s32.totalorder %s24, 1
        %s246 = scalar_select %p245, %s24, 1
        %p247 = scmp.lt.s32.totalorder %s244, 1
        %s248 = scalar_select %p247, %s244, 1
        %s249 = smul.addr %s246, 2
        %s250 = sadd.s32 %s248, %s249
        %s251 = smul.addr %s250, 4
        %s252 = scalar_lea.vmem %s0, %s251
        %s253 = smul.u32 2, %s25
        %s254 = smul.u32 2, %s25
        %v255 = vld [vmem:[%s1] sm:$0xff]
        %v256 = vld [vmem:[%s1 + $0x8] sm:$0xff]
        %v257 = vld [vmem:[%s1 + $0x10] sm:$0xff]
        %v258 = vld [vmem:[%s1 + $0x18] sm:$0xff]
        %v259 = vld [vmem:[%s1 + $0x20] sm:$0xff]
        %v260 = vld [vmem:[%s1 + $0x28] sm:$0xff]
        %v261 = vld [vmem:[%s1 + $0x30] sm:$0xff]
        %v262 = vld [vmem:[%s1 + $0x38] sm:$0xff]
        %v263 = vld [vmem:[%s1 + $0x40] sm:$0xff]
        %v264 = vld [vmem:[%s1 + $0x48] sm:$0xff]
        %v265 = vld [vmem:[%s1 + $0x50] sm:$0xff]
        %v266 = vld [vmem:[%s1 + $0x58] sm:$0xff]
        %v267 = vld [vmem:[%s1 + $0x60] sm:$0xff]
        %v268 = vld [vmem:[%s1 + $0x68] sm:$0xff]
        %v269 = vld [vmem:[%s1 + $0x70] sm:$0xff]
        %v270 = vld [vmem:[%s1 + $0x78] sm:$0xff]
        %v271 = vld [vmem:[%s2] sm:$0xff]
        %v272 = vld [vmem:[%s2 + $0x8] sm:$0xff]
        %v273 = vld [vmem:[%s2 + $0x10] sm:$0xff]
        %v274 = vld [vmem:[%s2 + $0x18] sm:$0xff]
        %v275 = vld [vmem:[%s2 + $0x20] sm:$0xff]
        %v276 = vld [vmem:[%s2 + $0x28] sm:$0xff]
        %v277 = vld [vmem:[%s2 + $0x30] sm:$0xff]
        %v278 = vld [vmem:[%s2 + $0x38] sm:$0xff]
        %v279 = vld [vmem:[%s2 + $0x40] sm:$0xff]
        %v280 = vld [vmem:[%s2 + $0x48] sm:$0xff]
        %v281 = vld [vmem:[%s2 + $0x50] sm:$0xff]
        %v282 = vld [vmem:[%s2 + $0x58] sm:$0xff]
        %v283 = vld [vmem:[%s2 + $0x60] sm:$0xff]
        %v284 = vld [vmem:[%s2 + $0x68] sm:$0xff]
        %v285 = vld [vmem:[%s2 + $0x70] sm:$0xff]
        %v286 = vld [vmem:[%s2 + $0x78] sm:$0xff]
        %v287 = vld [vmem:[%s3] sm:$0xff]
        %v288 = vld [vmem:[%s3 + $0x8] sm:$0xff]
        %v289 = vld [vmem:[%s3 + $0x10] sm:$0xff]
        %v290 = vld [vmem:[%s3 + $0x18] sm:$0xff]
        %v291 = vld [vmem:[%s3 + $0x20] sm:$0xff]
        %v292 = vld [vmem:[%s3 + $0x28] sm:$0xff]
        %v293 = vld [vmem:[%s3 + $0x30] sm:$0xff]
        %v294 = vld [vmem:[%s3 + $0x38] sm:$0xff]
        %v295 = vld [vmem:[%s3 + $0x40] sm:$0xff]
        %v296 = vld [vmem:[%s3 + $0x48] sm:$0xff]
        %v297 = vld [vmem:[%s3 + $0x50] sm:$0xff]
        %v298 = vld [vmem:[%s3 + $0x58] sm:$0xff]
        %v299 = vld [vmem:[%s3 + $0x60] sm:$0xff]
        %v300 = vld [vmem:[%s3 + $0x68] sm:$0xff]
        %v301 = vld [vmem:[%s3 + $0x70] sm:$0xff]
        %v302 = vld [vmem:[%s3 + $0x78] sm:$0xff]
        %s303 = sld [smem:[#allocation2]]
        %v304 = vld [vmem:[%s252] sm:$0xff]
        %306 = vset.pattern.permute.xlu0 0
        %307 = vperm.xlu0 %306, %v271
        %v308 = vpop.permute.xlu0 %307
        %311 = vset.pattern.permute.xlu0 0
        %312 = vperm.xlu0 %311, %v272
        %v313 = vpop.permute.xlu0 %312
        %316 = vset.pattern.permute.xlu0 0
        %317 = vperm.xlu0 %316, %v273
        %v318 = vpop.permute.xlu0 %317
        %321 = vset.pattern.permute.xlu0 0
        %322 = vperm.xlu0 %321, %v274
        %v323 = vpop.permute.xlu0 %322
        %326 = vset.pattern.permute.xlu0 0
        %327 = vperm.xlu0 %326, %v275
        %v328 = vpop.permute.xlu0 %327
        %331 = vset.pattern.permute.xlu0 0
        %332 = vperm.xlu0 %331, %v276
        %v333 = vpop.permute.xlu0 %332
        %336 = vset.pattern.permute.xlu0 0
        %337 = vperm.xlu0 %336, %v277
        %v338 = vpop.permute.xlu0 %337
        %341 = vset.pattern.permute.xlu0 0
        %342 = vperm.xlu0 %341, %v278
        %v343 = vpop.permute.xlu0 %342
        %346 = vset.pattern.permute.xlu0 0
        %347 = vperm.xlu0 %346, %v279
        %v348 = vpop.permute.xlu0 %347
        %351 = vset.pattern.permute.xlu0 0
        %352 = vperm.xlu0 %351, %v280
        %v353 = vpop.permute.xlu0 %352
        %356 = vset.pattern.permute.xlu0 0
        %357 = vperm.xlu0 %356, %v281
        %v358 = vpop.permute.xlu0 %357
        %361 = vset.pattern.permute.xlu0 0
        %362 = vperm.xlu0 %361, %v282
        %v363 = vpop.permute.xlu0 %362
        %366 = vset.pattern.permute.xlu0 0
        %367 = vperm.xlu0 %366, %v283
        %v368 = vpop.permute.xlu0 %367
        %371 = vset.pattern.permute.xlu0 0
        %372 = vperm.xlu0 %371, %v284
        %v373 = vpop.permute.xlu0 %372
        %376 = vset.pattern.permute.xlu0 0
        %377 = vperm.xlu0 %376, %v285
        %v378 = vpop.permute.xlu0 %377
        %381 = vset.pattern.permute.xlu0 0
        %382 = vperm.xlu0 %381, %v286
        %v383 = vpop.permute.xlu0 %382
        %v386 = vcombine.high %v304, %v304
        %vm387 = vcmask 31744
        %v389 = vsel %vm387, %v255, 0
        %v392 = vsel %vm387, %v256, 0
        %v395 = vsel %vm387, %v257, 0
        %v398 = vsel %vm387, %v258, 0
        %v401 = vsel %vm387, %v259, 0
        %v404 = vsel %vm387, %v260, 0
        %v407 = vsel %vm387, %v261, 0
        %v410 = vsel %vm387, %v262, 0
        %v413 = vsel %vm387, %v263, 0
        %v416 = vsel %vm387, %v264, 0
        %v419 = vsel %vm387, %v265, 0
        %v422 = vsel %vm387, %v266, 0
        %v425 = vsel %vm387, %v267, 0
        %v428 = vsel %vm387, %v268, 0
        %v431 = vsel %vm387, %v269, 0
        %v434 = vsel %vm387, %v270, 0
        %vm436 = vcmask 1043456
        %v437 = vsel %vm436, %v304, 0
        %v439 = vsel %vm436, %v386, 0
        %441 = vmatprep.subr.mxu0 0.0
        %442 = vmatpush1.msra.mxu0 0.0
        %443 = vmatprep.subr.mxu0 0.0
        %444 = vmatpush1.msra.mxu0 0.0
        %445 = vmatprep.subr.mxu0 0.0
        %446 = vmatpush1.msra.mxu0 0.0
        %447 = vmatprep.subr.mxu0 0.0
        %448 = vmatpush1.msra.mxu0 0.0
        %449 = vmatprep.subr.mxu0 0.0
        %450 = vmatpush1.msra.mxu0 0.0
        %451 = vmatprep.subr.mxu0 0.0
        %452 = vmatpush1.msra.mxu0 0.0
        %453 = vmatprep.subr.mxu0 0.0
        %454 = vmatpush1.msra.mxu0 0.0
        %455 = vmatprep.subr.mxu0 0.0
        %456 = vmatpush1.msra.mxu0 0.0
        %457 = vmatprep.subr.mxu0 0.0
        %458 = vmatpush1.msra.mxu0 0.0
        %459 = vmatprep.subr.mxu0 0.0
        %460 = vmatpush1.msra.mxu0 0.0
        %461 = vmatprep.subr.mxu0 0.0
        %462 = vmatpush1.msra.mxu0 0.0
        %463 = vmatprep.subr.mxu0 0.0
        %464 = vmatpush1.msra.mxu0 0.0
        %465 = vmatprep.subr.mxu0 0.0
        %466 = vmatpush1.msra.mxu0 0.0
        %467 = vmatprep.subr.mxu0 0.0
        %468 = vmatpush1.msra.mxu0 0.0
        %469 = vmatprep.subr.mxu0 0.0
        %470 = vmatpush1.msra.mxu0 0.0
        %471 = vmatprep.subr.mxu0 %v439
        %472 = vmatpush1.msra.mxu0 %v437
        %473 = vmatprep.subr.mxu0 0.0
        %474 = vmatpush2.msra.mxu0 0.0
        %475 = vmatprep.subr.mxu0 0.0
        %476 = vmatpush2.msra.mxu0 0.0
        %477 = vmatprep.subr.mxu0 0.0
        %478 = vmatpush2.msra.mxu0 0.0
        %479 = vmatprep.subr.mxu0 0.0
        %480 = vmatpush2.msra.mxu0 0.0
        %481 = vmatprep.subr.mxu0 0.0
        %482 = vmatpush2.msra.mxu0 0.0
        %483 = vmatprep.subr.mxu0 0.0
        %484 = vmatpush2.msra.mxu0 0.0
        %485 = vmatprep.subr.mxu0 0.0
        %486 = vmatpush2.msra.mxu0 0.0
        %487 = vmatprep.subr.mxu0 0.0
        %488 = vmatpush2.msra.mxu0 0.0
        %489 = vmatprep.subr.mxu0 0.0
        %490 = vmatpush2.msra.mxu0 0.0
        %491 = vmatprep.subr.mxu0 0.0
        %492 = vmatpush2.msra.mxu0 0.0
        %493 = vmatprep.subr.mxu0 0.0
        %494 = vmatpush2.msra.mxu0 0.0
        %495 = vmatprep.subr.mxu0 0.0
        %496 = vmatpush2.msra.mxu0 0.0
        %497 = vmatprep.subr.mxu0 0.0
        %498 = vmatpush2.msra.mxu0 0.0
        %499 = vmatprep.subr.mxu0 0.0
        %500 = vmatpush2.msra.mxu0 0.0
        %501 = vmatprep.subr.mxu0 0.0
        %502 = vmatpush2.msra.mxu0 0.0
        %503 = vmatprep.subr.mxu0 0.0
        %504 = vmatpush2.msra.mxu0 0.0
        %505 = vmatprep.mubr.f32.mxu0 0.0
        %506 = vmatmul.mubr.f32.gmra.mxu0 %v389
        %v507 = vpop.f32.mrf.mxu0
        %v508 = vadd.f32 %v308, %v507
        %v509 = vpop.f32.mrf.mxu0
        %v510 = vadd.f32 %v308, %v509
        %511 = vmatprep.mubr.f32.mxu0 0.0
        %512 = vmatmul.mubr.f32.gmra.mxu0 %v392
        %v513 = vpop.f32.mrf.mxu0
        %v514 = vadd.f32 %v313, %v513
        %v515 = vpop.f32.mrf.mxu0
        %v516 = vadd.f32 %v313, %v515
        %517 = vmatprep.mubr.f32.mxu0 0.0
        %518 = vmatmul.mubr.f32.gmra.mxu0 %v395
        %v519 = vpop.f32.mrf.mxu0
        %v520 = vadd.f32 %v318, %v519
        %v521 = vpop.f32.mrf.mxu0
        %v522 = vadd.f32 %v318, %v521
        %523 = vmatprep.mubr.f32.mxu0 0.0
        %524 = vmatmul.mubr.f32.gmra.mxu0 %v398
        %v525 = vpop.f32.mrf.mxu0
        %v526 = vadd.f32 %v323, %v525
        %v527 = vpop.f32.mrf.mxu0
        %v528 = vadd.f32 %v323, %v527
        %529 = vmatprep.mubr.f32.mxu0 0.0
        %530 = vmatmul.mubr.f32.gmra.mxu0 %v401
        %v531 = vpop.f32.mrf.mxu0
        %v532 = vadd.f32 %v328, %v531
        %v533 = vpop.f32.mrf.mxu0
        %v534 = vadd.f32 %v328, %v533
        %535 = vmatprep.mubr.f32.mxu0 0.0
        %536 = vmatmul.mubr.f32.gmra.mxu0 %v404
        %v537 = vpop.f32.mrf.mxu0
        %v538 = vadd.f32 %v333, %v537
        %v539 = vpop.f32.mrf.mxu0
        %v540 = vadd.f32 %v333, %v539
        %541 = vmatprep.mubr.f32.mxu0 0.0
        %542 = vmatmul.mubr.f32.gmra.mxu0 %v407
        %v543 = vpop.f32.mrf.mxu0
        %v544 = vadd.f32 %v338, %v543
        %v545 = vpop.f32.mrf.mxu0
        %v546 = vadd.f32 %v338, %v545
        %547 = vmatprep.mubr.f32.mxu0 0.0
        %548 = vmatmul.mubr.f32.gmra.mxu0 %v410
        %v549 = vpop.f32.mrf.mxu0
        %v550 = vadd.f32 %v343, %v549
        %v551 = vpop.f32.mrf.mxu0
        %v552 = vadd.f32 %v343, %v551
        %553 = vmatprep.mubr.f32.mxu0 0.0
        %554 = vmatmul.mubr.f32.gmra.mxu0 %v413
        %v555 = vpop.f32.mrf.mxu0
        %v556 = vadd.f32 %v348, %v555
        %v557 = vpop.f32.mrf.mxu0
        %v558 = vadd.f32 %v348, %v557
        %559 = vmatprep.mubr.f32.mxu0 0.0
        %560 = vmatmul.mubr.f32.gmra.mxu0 %v416
        %v561 = vpop.f32.mrf.mxu0
        %v562 = vadd.f32 %v353, %v561
        %v563 = vpop.f32.mrf.mxu0
        %v564 = vadd.f32 %v353, %v563
        %565 = vmatprep.mubr.f32.mxu0 0.0
        %566 = vmatmul.mubr.f32.gmra.mxu0 %v419
        %v567 = vpop.f32.mrf.mxu0
        %v568 = vadd.f32 %v358, %v567
        %v569 = vpop.f32.mrf.mxu0
        %v570 = vadd.f32 %v358, %v569
        %571 = vmatprep.mubr.f32.mxu0 0.0
        %572 = vmatmul.mubr.f32.gmra.mxu0 %v422
        %v573 = vpop.f32.mrf.mxu0
        %v574 = vadd.f32 %v363, %v573
        %v575 = vpop.f32.mrf.mxu0
        %v576 = vadd.f32 %v363, %v575
        %577 = vmatprep.mubr.f32.mxu0 0.0
        %578 = vmatmul.mubr.f32.gmra.mxu0 %v425
        %v579 = vpop.f32.mrf.mxu0
        %v580 = vadd.f32 %v368, %v579
        %v581 = vpop.f32.mrf.mxu0
        %v582 = vadd.f32 %v368, %v581
        %583 = vmatprep.mubr.f32.mxu0 0.0
        %584 = vmatmul.mubr.f32.gmra.mxu0 %v428
        %v585 = vpop.f32.mrf.mxu0
        %v586 = vadd.f32 %v373, %v585
        %v587 = vpop.f32.mrf.mxu0
        %v588 = vadd.f32 %v373, %v587
        %589 = vmatprep.mubr.f32.mxu0 0.0
        %590 = vmatmul.mubr.f32.gmra.mxu0 %v431
        %v591 = vpop.f32.mrf.mxu0
        %v592 = vadd.f32 %v378, %v591
        %v593 = vpop.f32.mrf.mxu0
        %v594 = vadd.f32 %v378, %v593
        %595 = vmatprep.mubr.f32.mxu0 0.0
        %596 = vmatmul.mubr.f32.gmra.mxu0 %v434
        %v597 = vpop.f32.mrf.mxu0
        %v598 = vadd.f32 %v383, %v597
        %v599 = vpop.f32.mrf.mxu0
        %v600 = vadd.f32 %v383, %v599
        %601 = vdwg.mxu0
        %v602 = vmax.f32 %v508, 0.0
        %v603 = vmax.f32 %v510, 0.0
        %v604 = vmax.f32 %v514, 0.0
        %v605 = vmax.f32 %v516, 0.0
        %v606 = vmax.f32 %v520, 0.0
        %v607 = vmax.f32 %v522, 0.0
        %v608 = vmax.f32 %v526, 0.0
        %v609 = vmax.f32 %v528, 0.0
        %v610 = vmax.f32 %v532, 0.0
        %v611 = vmax.f32 %v534, 0.0
        %v612 = vmax.f32 %v538, 0.0
        %v613 = vmax.f32 %v540, 0.0
        %v614 = vmax.f32 %v544, 0.0
        %v615 = vmax.f32 %v546, 0.0
        %v616 = vmax.f32 %v550, 0.0
        %v617 = vmax.f32 %v552, 0.0
        %v618 = vmax.f32 %v556, 0.0
        %v619 = vmax.f32 %v558, 0.0
        %v620 = vmax.f32 %v562, 0.0
        %v621 = vmax.f32 %v564, 0.0
        %v622 = vmax.f32 %v568, 0.0
        %v623 = vmax.f32 %v570, 0.0
        %v624 = vmax.f32 %v574, 0.0
        %v625 = vmax.f32 %v576, 0.0
        %v626 = vmax.f32 %v580, 0.0
        %v627 = vmax.f32 %v582, 0.0
        %v628 = vmax.f32 %v586, 0.0
        %v629 = vmax.f32 %v588, 0.0
        %v630 = vmax.f32 %v592, 0.0
        %v631 = vmax.f32 %v594, 0.0
        %v632 = vmax.f32 %v598, 0.0
        %v633 = vmax.f32 %v600, 0.0
        %635 = vset.pattern.permute.xlu0 0
        %636 = vperm.xlu0 %635, %v287
        %v637 = vpop.permute.xlu0 %636
        %640 = vset.pattern.permute.xlu0 0
        %641 = vperm.xlu0 %640, %v288
        %v642 = vpop.permute.xlu0 %641
        %645 = vset.pattern.permute.xlu0 0
        %646 = vperm.xlu0 %645, %v289
        %v647 = vpop.permute.xlu0 %646
        %650 = vset.pattern.permute.xlu0 0
        %651 = vperm.xlu0 %650, %v290
        %v652 = vpop.permute.xlu0 %651
        %655 = vset.pattern.permute.xlu0 0
        %656 = vperm.xlu0 %655, %v291
        %v657 = vpop.permute.xlu0 %656
        %660 = vset.pattern.permute.xlu0 0
        %661 = vperm.xlu0 %660, %v292
        %v662 = vpop.permute.xlu0 %661
        %665 = vset.pattern.permute.xlu0 0
        %666 = vperm.xlu0 %665, %v293
        %v667 = vpop.permute.xlu0 %666
        %670 = vset.pattern.permute.xlu0 0
        %671 = vperm.xlu0 %670, %v294
        %v672 = vpop.permute.xlu0 %671
        %675 = vset.pattern.permute.xlu0 0
        %676 = vperm.xlu0 %675, %v295
        %v677 = vpop.permute.xlu0 %676
        %680 = vset.pattern.permute.xlu0 0
        %681 = vperm.xlu0 %680, %v296
        %v682 = vpop.permute.xlu0 %681
        %685 = vset.pattern.permute.xlu0 0
        %686 = vperm.xlu0 %685, %v297
        %v687 = vpop.permute.xlu0 %686
        %690 = vset.pattern.permute.xlu0 0
        %691 = vperm.xlu0 %690, %v298
        %v692 = vpop.permute.xlu0 %691
        %695 = vset.pattern.permute.xlu0 0
        %696 = vperm.xlu0 %695, %v299
        %v697 = vpop.permute.xlu0 %696
        %700 = vset.pattern.permute.xlu0 0
        %701 = vperm.xlu0 %700, %v300
        %v702 = vpop.permute.xlu0 %701
        %705 = vset.pattern.permute.xlu0 0
        %706 = vperm.xlu0 %705, %v301
        %v707 = vpop.permute.xlu0 %706
        %710 = vset.pattern.permute.xlu0 0
        %711 = vperm.xlu0 %710, %v302
        %v712 = vpop.permute.xlu0 %711
        %v714 = vmul.f32 %v602, %v637
        %v715 = vmul.f32 %v603, %v637
        %v716 = vmul.f32 %v604, %v642
        %v717 = vmul.f32 %v605, %v642
        %v718 = vmul.f32 %v606, %v647
        %v719 = vmul.f32 %v607, %v647
        %v720 = vmul.f32 %v608, %v652
        %v721 = vmul.f32 %v609, %v652
        %v722 = vmul.f32 %v610, %v657
        %v723 = vmul.f32 %v611, %v657
        %v724 = vmul.f32 %v612, %v662
        %v725 = vmul.f32 %v613, %v662
        %v726 = vmul.f32 %v614, %v667
        %v727 = vmul.f32 %v615, %v667
        %v728 = vmul.f32 %v616, %v672
        %v729 = vmul.f32 %v617, %v672
        %v730 = vmul.f32 %v618, %v677
        %v731 = vmul.f32 %v619, %v677
        %v732 = vmul.f32 %v620, %v682
        %v733 = vmul.f32 %v621, %v682
        %v734 = vmul.f32 %v622, %v687
        %v735 = vmul.f32 %v623, %v687
        %v736 = vmul.f32 %v624, %v692
        %v737 = vmul.f32 %v625, %v692
        %v738 = vmul.f32 %v626, %v697
        %v739 = vmul.f32 %v627, %v697
        %v740 = vmul.f32 %v628, %v702
        %v741 = vmul.f32 %v629, %v702
        %v742 = vmul.f32 %v630, %v707
        %v743 = vmul.f32 %v631, %v707
        %v744 = vmul.f32 %v632, %v712
        %v745 = vmul.f32 %v633, %v712
        %v746 = vadd.f32 %v714, %v716
        %v747 = vadd.f32 %v746, %v718
        %v748 = vadd.f32 %v747, %v720
        %v749 = vadd.f32 %v748, %v722
        %v750 = vadd.f32 %v749, %v724
        %v751 = vadd.f32 %v750, %v726
        %v752 = vadd.f32 %v751, %v728
        %v753 = vadd.f32 %v752, %v730
        %v754 = vadd.f32 %v753, %v732
        %v755 = vadd.f32 %v754, %v734
        %v756 = vadd.f32 %v755, %v736
        %v757 = vadd.f32 %v756, %v738
        %v758 = vadd.f32 %v757, %v740
        %v759 = vadd.f32 %v758, %v742
        %v760 = vadd.f32 %v759, %v744
        %v761 = vrot.slane %v760, 4
        %v762 = vadd.f32 %v760, %v761
        %v763 = vrot.slane %v762, 2
        %v764 = vadd.f32 %v762, %v763
        %v765 = vrot.slane %v764, 1
        %v766 = vadd.f32 %v764, %v765
        %v767 = vadd.f32 %v715, %v717
        %v768 = vadd.f32 %v767, %v719
        %v769 = vadd.f32 %v768, %v721
        %v770 = vadd.f32 %v769, %v723
        %v771 = vadd.f32 %v770, %v725
        %v772 = vadd.f32 %v771, %v727
        %v773 = vadd.f32 %v772, %v729
        %v774 = vadd.f32 %v773, %v731
        %v775 = vadd.f32 %v774, %v733
        %v776 = vadd.f32 %v775, %v735
        %v777 = vadd.f32 %v776, %v737
        %v778 = vadd.f32 %v777, %v739
        %v779 = vadd.f32 %v778, %v741
        %v780 = vadd.f32 %v779, %v743
        %v781 = vadd.f32 %v780, %v745
        %v782 = vrot.slane %v781, 4
        %v783 = vadd.f32 %v781, %v782
        %v784 = vrot.slane %v783, 2
        %v785 = vadd.f32 %v783, %v784
        %v786 = vrot.slane %v785, 1
        %v787 = vadd.f32 %v785, %v786
        %v788 = vstv %s303
        %v789 = vadd.f32 %v766, %v788
        %v790 = vadd.f32 %v787, %v788
        %v793 = vcombine.low %v789, %v790
        %v795 = vunpack.c.l.s4 1966171168
        %v796 = vunpack.c.0.s8 %v795
        %v797 = vlaneseq
        %v798 = vshrl.u32 %v797, 7
        %v799 = vsub.s32 %v796, %v798
        %v800 = vrot.slane %v793, %v799
        %v802 = vunpack.c.l.s4 1966171168
        %v803 = vunpack.c.0.s8 %v802
        %v804 = vlaneseq
        %v805 = vshrl.u32 %v804, 7
        %v806 = vsub.s32 %v803, %v805
        %v807 = vrot.slane %v800, %v806
        %v809 = vlaneseq
        %vm810 = vcmp.ge.s32.totalorder %v809, 0
        %vm811 = vcmp.lt.s32.totalorder %v809, 256
        %vm812 = vmand %vm810, %vm811
        %813 = vst.msk [vmem:[%s243] sm:$0x3] %vm812, %v807
        %s814 = sand.u32 %s154, 1
        %s815 = scalar_lea.sflag [#allocation4], %s814
        %s816 = sand.u32 %s154, 1
        %s817 = smul.addr %s816, 2
        %s818 = scalar_lea.vmem [#allocation3], %s817
        // Predicated region
        $region41: #{tpu_custom_call.1} parent=39 // pred_check
          %p819 = pneg %p164
        $region42: #{tpu_custom_call.1} parent=39 // pred_check_branch
          %821 = sbr.rel (%p819) target = $region44
        $region43: #{tpu_custom_call.1} parent=39 // pred_region
          %s822 = smul.u32 2, %s25
          %s824 = ssub.s32 32, 32
          %825 = vsyncadd %s815, %s824
          %s826 = smul.addr %s24, 2
          %s827 = sadd.s32 %s822, %s826
          %s828 = smul.addr %s827, 16
          %s829 = scalar_lea.hbm %s5, %s828
          %s831 = sshll.u32 %s818, 4
          %s832 = int_to_ptr.vmem [resolvable:$true] %s831
          %834 = dma.vmem_to_hbm [thread:$0]  %s832, 32, %s829, %s815
        $region44: #{tpu_custom_call.1} parent=39 // pred_fallthru
          _
      $region40: #{tpu_custom_call.1} parent=5 // pred_fallthru
        _
      %p835 = scmp.le.s32.totalorder 2, %s15
      // Predicated region
      $region45: #{tpu_custom_call.1} parent=5 // pred_check
        %p836 = pneg %p835
      $region46: #{tpu_custom_call.1} parent=5 // pred_check_branch
        %838 = sbr.rel (%p836) target = $region48
      $region47: #{tpu_custom_call.1} parent=5 // pred_region
        %s839 = ssub.s32 %s15, 2
        // Predicated region
        $region49: #{tpu_custom_call.1} parent=47 // pred_check
          %p840 = pneg %p170
        $region50: #{tpu_custom_call.1} parent=47 // pred_check_branch
          %842 = sbr.rel (%p840) target = $region52
        $region51: #{tpu_custom_call.1} parent=47 // pred_region
          %s843 = sand.u32 %s155, 1
          %s844 = scalar_lea.sflag [#allocation4], %s843
          %s845 = sand.u32 %s155, 1
          %s846 = smul.addr %s845, 2
          %s847 = scalar_lea.vmem [#allocation3], %s846
          %848 = dma.done %s844, 32
        $region52: #{tpu_custom_call.1} parent=47 // pred_fallthru
          _
      $region48: #{tpu_custom_call.1} parent=5 // pred_fallthru
        _
    $region6: #{tpu_custom_call.1} parent=1 // loop_footer
      %s19 = sadd.s32 1, %s15
    $region7: #{tpu_custom_call.1} parent=1 // loop_footer_branch
      %14 = sbr.rel target = $region3
    $region8: #{tpu_custom_call.1} parent=1 // loop_exit
      _
    %849 = vsyncpa [#allocation4], 1
    %s850 = scalar_lea.sflag [#allocation4], 1
    %851 = vsyncpa %s850, 1

</llo_original>
